<compile_context>
chip_gen: v7x
topology: tpu7x:2x2x1
jax: 0.10.0
libtpu: 0.0.40
codegen_flags: <defaults>
</compile_context>

<pallas_src>
import functools

import jax
import jax.numpy as jnp
from jax import lax
from jax.experimental import pallas as pl
from jax.experimental.pallas import tpu as pltpu


def _deconv_kernel(x_ref, w_ref, b_ref, out_ref, stack_ref, *, K, P, L):
    # x_ref    : (C_in, NL_blk)    folded input block (batch*length on lanes)
    # w_ref    : (C_out, KC_pad)   weights, (k, c_in)-major, zero-padded cols
    # b_ref    : (C_out, 1)        bias column (f32)
    # out_ref  : (C_out, NL_blk)   tanh(conv1d(x)), lane-dense
    # stack_ref: (KC_pad, NL_blk)  f32 VMEM scratch holding the shifted taps
    x = x_ref[...].astype(jnp.float32)                     # (C_in, NL)
    c_in, nl = x.shape
    kc = K * c_in
    kc_pad = stack_ref.shape[0]

    # Within-item lane position, built once at broadcast-1 shape (1, NL).
    pos = lax.broadcasted_iota(jnp.int32, (1, nl), 1) % L

    # Build the tap stack: tap k holds x shifted by (k - P) lanes; lanes whose
    # source falls outside the current batch item are zeroed (== the conv's
    # zero padding, and the batch-boundary guard of the folded layout).
    for k in range(K):                                     # K static -> unrolled
        s = k - P
        if s == 0:
            xk = x
        else:
            xk = pltpu.roll(x, (-s) % nl, axis=1)          # XLU, overlaps VPU
            valid = (pos < L - s) if s > 0 else (pos >= -s)
            xk = jnp.where(valid, xk, 0.0)
        stack_ref[k * c_in:(k + 1) * c_in, :] = xk
    if kc_pad > kc:                                        # zero the pad rows
        stack_ref[kc:, :] = jnp.zeros((kc_pad - kc, nl), jnp.float32)

    # Single MXU contraction over all K*C_in taps; accumulation stays inside
    # the MXU, so the (C_out, NL) accumulator is produced in one pass.
    acc = jnp.dot(w_ref[...].astype(jnp.float32), stack_ref[...],
                  preferred_element_type=jnp.float32,
                  precision=lax.Precision.HIGHEST)         # (C_out, NL), f32
    # Bias + tanh fused into the single pass that consumes the MXU result.
    out_ref[...] = jnp.tanh(acc + b_ref[...]).astype(out_ref.dtype)


def _pick_items_per_block(n, l):
    """Batch items per grid block in the folded (C, N*L) layout.

    Blocks are uniform (nb divides N) and lane-dense: nb*L is a multiple of
    128 or the block covers the full lane extent.  Preference: >=512 lanes per
    block (pipeline-efficiency knee), then >=2 blocks (megacore / both v7x
    TensorCores), then the smallest such block (bounds VMEM for long L).
    """
    valid = [nb for nb in range(1, n + 1)
             if n % nb == 0 and ((nb * l) % 128 == 0 or nb == n)]

    def rank(nb):
        lanes, nblk = nb * l, n // nb
        return (lanes >= 512, nblk >= 2, -lanes)

    return max(valid, key=rank)


def deconv_block_forward(x_ncl, weight, bias):
    """tanh(Conv1d(x)) — the tensor deconv_block.forward returns (pre-BN).

    x_ncl: (N, C_in, L); weight: (C_out, C_in, K); bias: (C_out,).
    Returns (N, C_out, L_out), L_out = L + 2*((K-1)//2) - K + 1 (== L, odd K).
    """
    N, C_in, L = x_ncl.shape
    C_out, _, K = weight.shape
    P = (K - 1) // 2
    L_out = L + 2 * P - K + 1

    # Fold batch into the lane axis (layout plumbing only).
    x2 = jnp.transpose(x_ncl, (1, 0, 2)).reshape(C_in, N * L)

    # Weights pre-shaped to (C_out, K*C_in) in (k, c_in)-major order to match
    # the in-kernel tap stack; contraction dim zero-padded to a sublane
    # multiple so the MXU operand is never ragged.
    kc = K * C_in
    kc_pad = ((kc + 7) // 8) * 8
    w2 = jnp.transpose(weight, (0, 2, 1)).reshape(C_out, kc)
    if kc_pad > kc:
        w2 = jnp.pad(w2, ((0, 0), (0, kc_pad - kc)))
    b2 = bias.reshape(C_out, 1).astype(jnp.float32)

    nb = _pick_items_per_block(N, L)
    nl_blk = nb * L
    grid = (N // nb,)

    kernel = functools.partial(_deconv_kernel, K=K, P=P, L=L)

    out2 = pl.pallas_call(
        kernel,
        out_shape=jax.ShapeDtypeStruct((C_out, N * L), x_ncl.dtype),
        grid_spec=pltpu.PrefetchScalarGridSpec(
            num_scalar_prefetch=0,
            grid=grid,
            in_specs=[
                pl.BlockSpec((C_in, nl_blk), lambda i: (0, i)),
                pl.BlockSpec((C_out, kc_pad), lambda i: (0, 0)),
                pl.BlockSpec((C_out, 1), lambda i: (0, 0)),
            ],
            out_specs=pl.BlockSpec((C_out, nl_blk), lambda i: (0, i)),
            scratch_shapes=[pltpu.VMEM((kc_pad, nl_blk), jnp.float32)],
        ),
        compiler_params=pltpu.CompilerParams(
            dimension_semantics=("parallel",),
            vmem_limit_bytes=64 * 1024 * 1024),
    )(x2, w2, b2)

    # Unfold back to NCL; for even K drop the extra trailing column per item.
    out = out2.reshape(C_out, N, L).transpose(1, 0, 2)
    return out[:, :, :L_out] if L_out != L else out


def _reference(x_ncl, weight, bias):
    # Pure-JAX reference: conv1d (PyTorch padding=(K-1)//2) + tanh, NCL layout.
    P = (weight.shape[-1] - 1) // 2
    y = lax.conv_general_dilated(
        x_ncl, weight, window_strides=(1,), padding=[(P, P)],
        dimension_numbers=("NCH", "OIH", "NCH"),
        precision=lax.Precision.HIGHEST)
    return jnp.tanh(y + bias[None, :, None])


if __name__ == "__main__":
    # Small shapes consistent with the module: nin=4, nout=8, kernel_size=3.
    N, C_in, L = 2, 4, 16
    C_out, K = 8, 3

    key = jax.random.PRNGKey(0)
    kx, kw, kb = jax.random.split(key, 3)
    x = jax.random.normal(kx, (N, C_in, L), dtype=jnp.float32)

    # Deterministic parameter init (PyTorch-style uniform bound).
    bound = 1.0 / jnp.sqrt(jnp.float32(C_in * K))
    weight = jax.random.uniform(kw, (C_out, C_in, K), jnp.float32, -bound, bound)
    bias = jax.random.uniform(kb, (C_out,), jnp.float32, -bound, bound)

    out = jax.block_until_ready(deconv_block_forward(x, weight, bias))

    ref = _reference(x, weight, bias)
    assert out.shape == ref.shape == (N, C_out, L)
    assert jnp.allclose(out, ref, atol=1e-5, rtol=1e-5)

    print("KERNEL_OK")
</pallas_src>

<mosaic_0001>
module attributes {stable_mosaic.version = 11 : i64} {
  func.func @_deconv_kernel(%arg0: i32, %arg1: memref<4x32xf32, #tpu.memory_space<vmem>>, %arg2: memref<8x16xf32, #tpu.memory_space<vmem>>, %arg3: memref<8x1xf32, #tpu.memory_space<vmem>>, %arg4: memref<8x32xf32, #tpu.memory_space<vmem>>, %arg5: memref<16x32xf32, #tpu.memory_space<vmem>>) attributes {dimension_semantics = [#tpu.dimension_semantics<parallel>], iteration_bounds = array<i64: 1>, scalar_prefetch = 0 : i64, scratch_operands = 1 : i64, tpu.core_type = #tpu.core_type<tc>, window_params = [{transform_indices = @transform_0, window_bounds = array<i64: 4, 32>}, {pipeline_mode = #tpu.pipeline_mode<synchronous>, transform_indices = @transform_1, window_bounds = array<i64: 8, 16>}, {pipeline_mode = #tpu.pipeline_mode<synchronous>, transform_indices = @transform_2, window_bounds = array<i64: 8, 1>}, {transform_indices = @transform_3, window_bounds = array<i64: 8, 32>}]} {
    %c0 = arith.constant 0 : index
    %c0_0 = arith.constant 0 : index
    %0 = vector.load %arg1[%c0, %c0_0] : memref<4x32xf32, #tpu.memory_space<vmem>>, vector<4x32xf32>
    %1 = tpu.iota {dimensions = array<i32: 1>} : vector<1x32xi32>
    %c16_i32 = arith.constant 16 : i32
    %c0_i32 = arith.constant 0 : i32
    %2 = arith.cmpi eq, %c16_i32, %c0_i32 : i32
    %c1_i32 = arith.constant 1 : i32
    %3 = arith.select %2, %c1_i32, %c16_i32 : i32
    %4 = vector.broadcast %3 : i32 to vector<1x32xi32>
    %5 = arith.remsi %1, %4 : vector<1x32xi32>
    %c0_i32_1 = arith.constant 0 : i32
    %6 = vector.broadcast %c0_i32_1 : i32 to vector<1x32xi32>
    %7 = arith.cmpi ne, %5, %6 : vector<1x32xi32>
    %c0_i32_2 = arith.constant 0 : i32
    %8 = vector.broadcast %c0_i32_2 : i32 to vector<1x32xi32>
    %9 = arith.cmpi slt, %5, %8 : vector<1x32xi32>
    %c0_i32_3 = arith.constant 0 : i32
    %10 = arith.cmpi slt, %3, %c0_i32_3 : i32
    %11 = vector.broadcast %10 : i1 to vector<1x32xi1>
    %12 = vector.broadcast %11 : vector<1x32xi1> to vector<1x32xi1>
    %13 = arith.xori %9, %12 : vector<1x32xi1>
    %14 = arith.andi %13, %7 : vector<1x32xi1>
    %15 = vector.broadcast %3 : i32 to vector<1x32xi32>
    %16 = arith.addi %5, %15 : vector<1x32xi32>
    %17 = arith.select %14, %16, %5 : vector<1x32xi1>, vector<1x32xi32>
    %c1_i32_4 = arith.constant 1 : i32
    %18 = tpu.dynamic_rotate %0 by %c1_i32_4 dim 1 : vector<4x32xf32>, i32 -> vector<4x32xf32>
    %c1_i32_5 = arith.constant 1 : i32
    %19 = vector.broadcast %c1_i32_5 : i32 to vector<1x32xi32>
    %20 = arith.cmpi sge, %17, %19 : vector<1x32xi32>
    %cst = arith.constant 0.000000e+00 : f32
    %21 = vector.shape_cast %20 : vector<1x32xi1> to vector<1x32xi1>
    %22 = vector.broadcast %21 : vector<1x32xi1> to vector<4x32xi1>
    %23 = vector.broadcast %cst : f32 to vector<4x32xf32>
    %24 = arith.select %22, %18, %23 : vector<4x32xi1>, vector<4x32xf32>
    %c0_6 = arith.constant 0 : index
    %c0_7 = arith.constant 0 : index
    %25 = vector.load %arg5[%c0_6, %c0_7] : memref<16x32xf32, #tpu.memory_space<vmem>>, vector<4x32xf32>
    tpu.vector_store %arg5[%c0_6, %c0_7], %24 {strides = array<i32>} : memref<16x32xf32, #tpu.memory_space<vmem>>, vector<4x32xf32>,
    %c4 = arith.constant 4 : index
    %c0_8 = arith.constant 0 : index
    %26 = vector.load %arg5[%c4, %c0_8] : memref<16x32xf32, #tpu.memory_space<vmem>>, vector<4x32xf32>
    tpu.vector_store %arg5[%c4, %c0_8], %0 {strides = array<i32>} : memref<16x32xf32, #tpu.memory_space<vmem>>, vector<4x32xf32>,
    %c31_i32 = arith.constant 31 : i32
    %27 = tpu.dynamic_rotate %0 by %c31_i32 dim 1 : vector<4x32xf32>, i32 -> vector<4x32xf32>
    %c15_i32 = arith.constant 15 : i32
    %28 = vector.broadcast %c15_i32 : i32 to vector<1x32xi32>
    %29 = arith.cmpi slt, %17, %28 : vector<1x32xi32>
    %cst_9 = arith.constant 0.000000e+00 : f32
    %30 = vector.shape_cast %29 : vector<1x32xi1> to vector<1x32xi1>
    %31 = vector.broadcast %30 : vector<1x32xi1> to vector<4x32xi1>
    %32 = vector.broadcast %cst_9 : f32 to vector<4x32xf32>
    %33 = arith.select %31, %27, %32 : vector<4x32xi1>, vector<4x32xf32>
    %c8 = arith.constant 8 : index
    %c0_10 = arith.constant 0 : index
    %34 = vector.load %arg5[%c8, %c0_10] : memref<16x32xf32, #tpu.memory_space<vmem>>, vector<4x32xf32>
    tpu.vector_store %arg5[%c8, %c0_10], %33 {strides = array<i32>} : memref<16x32xf32, #tpu.memory_space<vmem>>, vector<4x32xf32>,
    %cst_11 = arith.constant 0.000000e+00 : f32
    %35 = vector.broadcast %cst_11 : f32 to vector<4x32xf32>
    %c12 = arith.constant 12 : index
    %c0_12 = arith.constant 0 : index
    %36 = vector.load %arg5[%c12, %c0_12] : memref<16x32xf32, #tpu.memory_space<vmem>>, vector<4x32xf32>
    tpu.vector_store %arg5[%c12, %c0_12], %35 {strides = array<i32>} : memref<16x32xf32, #tpu.memory_space<vmem>>, vector<4x32xf32>,
    %c0_13 = arith.constant 0 : index
    %c0_14 = arith.constant 0 : index
    %37 = vector.load %arg2[%c0_13, %c0_14] : memref<8x16xf32, #tpu.memory_space<vmem>>, vector<8x16xf32>
    %c0_15 = arith.constant 0 : index
    %c0_16 = arith.constant 0 : index
    %38 = vector.load %arg5[%c0_15, %c0_16] : memref<16x32xf32, #tpu.memory_space<vmem>>, vector<16x32xf32>
    %cst_17 = arith.constant dense<0.000000e+00> : vector<8x32xf32>
    %39 = tpu.matmul %37, %38, %cst_17 {dimension_numbers = #tpu.dot_dimension_numbers<[1], [0], [0], [1], [0, 0, 1, 1], [], []>, precision = #tpu.contract_precision<fp32>} : vector<8x16xf32>, vector<16x32xf32>, vector<8x32xf32> -> vector<8x32xf32>
    %c0_18 = arith.constant 0 : index
    %c0_19 = arith.constant 0 : index
    %40 = vector.load %arg3[%c0_18, %c0_19] : memref<8x1xf32, #tpu.memory_space<vmem>>, vector<8x1xf32>
    %41 = vector.broadcast %40 : vector<8x1xf32> to vector<8x32xf32>
    %42 = arith.addf %39, %41 : vector<8x32xf32>
    %43 = math.tanh %42 : vector<8x32xf32>
    %c0_20 = arith.constant 0 : index
    %c0_21 = arith.constant 0 : index
    %44 = vector.load %arg4[%c0_20, %c0_21] : memref<8x32xf32, #tpu.memory_space<vmem>>, vector<8x32xf32>
    tpu.vector_store %arg4[%c0_20, %c0_21], %43 {strides = array<i32>} : memref<8x32xf32, #tpu.memory_space<vmem>>, vector<8x32xf32>,
    return
  }
  func.func @transform_0(%arg0: i32) -> (i32, i32) {
    %c0_i32 = arith.constant 0 : i32
    %c0_i32_0 = arith.constant 0 : i32
    return %c0_i32, %arg0 : i32, i32
  }
  func.func @transform_1(%arg0: i32) -> (i32, i32) {
    %c0_i32 = arith.constant 0 : i32
    %c0_i32_0 = arith.constant 0 : i32
    %c0_i32_1 = arith.constant 0 : i32
    return %c0_i32, %c0_i32_0 : i32, i32
  }
  func.func @transform_2(%arg0: i32) -> (i32, i32) {
    %c0_i32 = arith.constant 0 : i32
    %c0_i32_0 = arith.constant 0 : i32
    %c0_i32_1 = arith.constant 0 : i32
    return %c0_i32, %c0_i32_0 : i32, i32
  }
  func.func @transform_3(%arg0: i32) -> (i32, i32) {
    %c0_i32 = arith.constant 0 : i32
    %c0_i32_0 = arith.constant 0 : i32
    return %c0_i32, %arg0 : i32, i32
  }
}

</mosaic_0001>

<llo_original>
// kernel: tpu_custom_call.1
$region0: #{tpu_custom_call.1}
  #allocation0 [shape = 'u32[]', space=smem, size = 0x4, offset = 0x4, fixed_abs, tag = 'smem constant byte address 0x4 - core index']
  #allocation1 [shape = 'u32[144,128]{1,0:T(1,128)}', space=vmem, size = 0x12000, scoped, tag = 'internal scratch']
  #allocation2 [shape = 'f32[16,32]{1,0:T(8,128)}', space=vmem, size = 0x2000, scoped, tag = 'scratch operand']
  %s0 = inlined_call_operand.hbm [shape: f32[4,32], index: 0, kind: input, shape index: {}]
  %s1 = inlined_call_operand.hbm [shape: f32[8,16], index: 1, kind: input, shape index: {}]
  %s2 = inlined_call_operand.hbm [shape: f32[8,1], index: 2, kind: input, shape index: {}]
  %s3 = inlined_call_operand.hbm [shape: f32[8,32], index: 3, kind: output, shape index: {}]
  %s4 = sld [smem:[#allocation0]]
  $region34: #{tpu_custom_call.1} parent=0
    _
  %s6 = ssub.s32 1, %s4
  %s7 = scalar_select 0, %s6, %s4
  $region1: #{tpu_custom_call.1} parent=0
    #allocation3 [shape = 'u8[2048]{0}', space=vmem, size = 0x800, scoped, tag = 'input window, operand 0, single buffered']
    #allocation4 [shape = 's32[1]{0}', space=sflag, size = 0x4, scoped, tag = 'scoped memory for tpu_custom_call.1']
    #allocation5 [shape = 's32[1]{0}', space=sflag, size = 0x4, scoped, tag = 'scoped memory for tpu_custom_call.1']
    #allocation6 [shape = 'u8[4096]{0}', space=vmem, size = 0x1000, scoped, tag = 'input window, operand 1, single buffered']
    #allocation7 [shape = 's32[1]{0}', space=sflag, size = 0x4, scoped, tag = 'scoped memory for tpu_custom_call.1']
    #allocation8 [shape = 'u8[4096]{0}', space=vmem, size = 0x1000, scoped, tag = 'input window, operand 2, single buffered']
    #allocation9 [shape = 'u8[4096]{0}', space=vmem, size = 0x1000, scoped, tag = 'output window, operand 0, single buffered']
    %8 = vsyncpa [#allocation4], 0
    %9 = vsyncpa [#allocation7], 0
    %10 = vsyncpa [#allocation5], 0
    // Predicated region
    $region2: #{tpu_custom_call.1} parent=1 // pred_check
      _
    $region3: #{tpu_custom_call.1} parent=1 // pred_check_branch
      %12 = sbr.rel (0) target = $region5
    $region4: #{tpu_custom_call.1} parent=1 // pred_region
      %s14 = ssub.s32 64, 64
      %15 = vsyncadd [#allocation4], %s14
      %s17 = sshll.u32 [#allocation3], 4
      %s18 = int_to_ptr.vmem [resolvable:$true] %s17
      %20 = dma.hbm_to_vmem [thread:$0]  %s0, 64, %s18, [#allocation4]
    $region5: #{tpu_custom_call.1} parent=1 // pred_fallthru
      _
    // Predicated region
    $region6: #{tpu_custom_call.1} parent=1 // pred_check
      _
    $region7: #{tpu_custom_call.1} parent=1 // pred_check_branch
      %22 = sbr.rel (0) target = $region9
    $region8: #{tpu_custom_call.1} parent=1 // pred_region
      %s24 = ssub.s32 128, 128
      %25 = vsyncadd [#allocation7], %s24
      %s27 = sshll.u32 [#allocation6], 4
      %s28 = int_to_ptr.vmem [resolvable:$true] %s27
      %30 = dma.hbm_to_vmem [thread:$0]  %s1, 128, %s28, [#allocation7]
    $region9: #{tpu_custom_call.1} parent=1 // pred_fallthru
      _
    // Predicated region
    $region10: #{tpu_custom_call.1} parent=1 // pred_check
      _
    $region11: #{tpu_custom_call.1} parent=1 // pred_check_branch
      %32 = sbr.rel (0) target = $region13
    $region12: #{tpu_custom_call.1} parent=1 // pred_region
      %s34 = ssub.s32 128, 128
      %35 = vsyncadd [#allocation7], %s34
      %s37 = sshll.u32 [#allocation8], 4
      %s38 = int_to_ptr.vmem [resolvable:$true] %s37
      %40 = dma.hbm_to_vmem [thread:$0]  %s2, 128, %s38, [#allocation7]
    $region13: #{tpu_custom_call.1} parent=1 // pred_fallthru
      _
    // Predicated region
    $region14: #{tpu_custom_call.1} parent=1 // pred_check
      _
    $region15: #{tpu_custom_call.1} parent=1 // pred_check_branch
      %42 = sbr.rel (0) target = $region17
    $region16: #{tpu_custom_call.1} parent=1 // pred_region
      %43 = dma.done [#allocation4], 64
    $region17: #{tpu_custom_call.1} parent=1 // pred_fallthru
      _
    // Predicated region
    $region18: #{tpu_custom_call.1} parent=1 // pred_check
      _
    $region19: #{tpu_custom_call.1} parent=1 // pred_check_branch
      %45 = sbr.rel (0) target = $region21
    $region20: #{tpu_custom_call.1} parent=1 // pred_region
      %46 = dma.done [#allocation7], 128
    $region21: #{tpu_custom_call.1} parent=1 // pred_fallthru
      _
    // Predicated region
    $region22: #{tpu_custom_call.1} parent=1 // pred_check
      _
    $region23: #{tpu_custom_call.1} parent=1 // pred_check_branch
      %48 = sbr.rel (0) target = $region25
    $region24: #{tpu_custom_call.1} parent=1 // pred_region
      %49 = dma.done [#allocation7], 128
    $region25: #{tpu_custom_call.1} parent=1 // pred_fallthru
      _
    %v50 = vld [vmem:[#allocation3] sm:$0xf]
    %v51 = vlaneseq
    %v52 = vand.u32 %v51, 127
    %vm53 = vcmp.lt.s32.totalorder %v52, 0
    %v54 = vsub.s32 0, %v52
    %v55 = vsel %vm53, %v54, %v52
    %v56 = vshrl.u32 %v55, 4
    %v57 = vand.u32 %v55, 15
    %v58 = vsub.s32 0, %v57
    %v59 = vsel %vm53, %v58, %v57
    %vm60 = vcmp.ne.s32.totalorder %v59, 0
    %vm61 = vcmp.lt.s32.totalorder %v59, 0
    %vm62 = vmand %vm61, %vm60
    %v63 = vadd.s32 %v59, 16
    %v64 = vsel %vm62, %v63, %v59
    %vm65 = vcmask 1047808
    %66 = vrot.lane.b32.xlu0 %v50, 32
    %v67 = vpop.permute.xlu0 %66
    %v68 = vsel %vm65, %v67, %v50
    %69 = vrot.lane.b32.xlu0 %v68, 32
    %v70 = vpop.permute.xlu0 %69
    %v71 = vsel %vm65, %v70, %v50
    %vm72 = vcmp.ge.s32.totalorder %v64, 1
    %v73 = vsel %vm72, 1, 0
    %vm74 = vcmp.eq.s32.totalorder %v73, 1
    %76 = vrot.lane.b32.xlu0 %v71, 97
    %v77 = vpop.permute.xlu0 %76
    %v79 = vsel %vm74, %v77, 0.0
    %vm80 = vcmask 257024
    %81 = vst.msk [vmem:[#allocation2] sm:$0xf] %vm80, %v79
    %82 = vst.msk [vmem:[#allocation2 + $0x4] sm:$0xf] %vm80, %v50
    %vm83 = vcmp.lt.s32.totalorder %v64, 15
    %v84 = vsel %vm83, 1, 0
    %vm85 = vcmp.eq.s32.totalorder %v84, 1
    %86 = vrot.lane.b32.xlu0 %v71, 127
    %v87 = vpop.permute.xlu0 %86
    %v89 = vsel %vm85, %v87, 0.0
    %90 = vst.msk [vmem:[#allocation2 + $0x8] sm:$0xf] %vm80, %v89
    %91 = vst.msk [vmem:[#allocation2 + $0xc] sm:$0xf] %vm80, 0.0
    %v92 = vld [vmem:[#allocation6] sm:$0xff]
    %v93 = vld [vmem:[#allocation2] sm:$0xff]
    %v94 = vld [vmem:[#allocation2 + $0x8] sm:$0xff]
    %v95 = vld [vmem:[#allocation8] sm:$0xff]
    %97 = vset.pattern.permute.xlu0 0
    %98 = vperm.xlu0 %97, %v95
    %v99 = vpop.permute.xlu0 %98
    %vm101 = vcmask 130048
    %v103 = vsel %vm101, %v92, 0
    %105 = vmatprep.subr.mxu0 0.0
    %v106 = vand.u32 %v93, 4294901760
    %107 = vmatpush1.msra.mxu0 %v106
    %108 = vmatprep.subr.mxu0 0.0
    %v109 = vand.u32 %v94, 4294901760
    %110 = vmatpush1.msra.mxu0 %v109
    %111 = vmatprep.subr.mxu0 0.0
    %112 = vmatpush1.msra.mxu0 0.0
    %113 = vmatprep.subr.mxu0 0.0
    %114 = vmatpush1.msra.mxu0 0.0
    %115 = vmatprep.subr.mxu0 0.0
    %116 = vmatpush1.msra.mxu0 0.0
    %117 = vmatprep.subr.mxu0 0.0
    %118 = vmatpush1.msra.mxu0 0.0
    %119 = vmatprep.subr.mxu0 0.0
    %120 = vmatpush1.msra.mxu0 0.0
    %121 = vmatprep.subr.mxu0 0.0
    %122 = vmatpush1.msra.mxu0 0.0
    %123 = vmatprep.subr.mxu0 0.0
    %124 = vmatpush1.msra.mxu0 0.0
    %125 = vmatprep.subr.mxu0 0.0
    %126 = vmatpush1.msra.mxu0 0.0
    %127 = vmatprep.subr.mxu0 0.0
    %128 = vmatpush1.msra.mxu0 0.0
    %129 = vmatprep.subr.mxu0 0.0
    %130 = vmatpush1.msra.mxu0 0.0
    %131 = vmatprep.subr.mxu0 0.0
    %132 = vmatpush1.msra.mxu0 0.0
    %133 = vmatprep.subr.mxu0 0.0
    %134 = vmatpush1.msra.mxu0 0.0
    %135 = vmatprep.subr.mxu0 0.0
    %136 = vmatpush1.msra.mxu0 0.0
    %137 = vmatprep.subr.mxu0 0.0
    %138 = vmatpush1.msra.mxu0 0.0
    %139 = vmatprep.subr.mxu0 0.0
    %140 = vmatpush1.msra.mxu0 0.0
    %141 = vmatprep.subr.mxu0 0.0
    %142 = vmatpush1.msra.mxu0 0.0
    %143 = vmatprep.subr.mxu0 0.0
    %144 = vmatpush1.msra.mxu0 0.0
    %145 = vmatprep.subr.mxu0 0.0
    %146 = vmatpush1.msra.mxu0 0.0
    %147 = vmatprep.subr.mxu0 0.0
    %148 = vmatpush1.msra.mxu0 0.0
    %149 = vmatprep.subr.mxu0 0.0
    %150 = vmatpush1.msra.mxu0 0.0
    %151 = vmatprep.subr.mxu0 0.0
    %152 = vmatpush1.msra.mxu0 0.0
    %153 = vmatprep.subr.mxu0 0.0
    %154 = vmatpush1.msra.mxu0 0.0
    %155 = vmatprep.subr.mxu0 0.0
    %156 = vmatpush1.msra.mxu0 0.0
    %157 = vmatprep.subr.mxu0 0.0
    %158 = vmatpush1.msra.mxu0 0.0
    %159 = vmatprep.subr.mxu0 0.0
    %160 = vmatpush1.msra.mxu0 0.0
    %161 = vmatprep.subr.mxu0 0.0
    %162 = vmatpush1.msra.mxu0 0.0
    %163 = vmatprep.subr.mxu0 0.0
    %164 = vmatpush1.msra.mxu0 0.0
    %165 = vmatprep.subr.mxu0 0.0
    %166 = vmatpush1.msra.mxu0 0.0
    %167 = vmatprep.subr.mxu0 0.0
    %168 = vmatpush1.msra.mxu0 0.0
    %169 = vmatprep.subr.mxu0 0.0
    %170 = vmatpush1.msra.mxu0 0.0
    %171 = vmatprep.mubr.f32.mxu0 0.0
    %v172 = vand.u32 %v103, 4294901760
    %v173 = vsub.f32 %v103, %v172
    %v174 = vand.u32 %v173, 4294901760
    %v175 = vsub.f32 %v173, %v174
    %v176 = vand.u32 %v175, 4294901760
    %177 = vmatmul.mubr.f32.gmra.mrb[0].mxu0 %v176
    %v178 = vpop.f32.mrb[0].mxu0
    %v179 = vadd.f32 %v99, %v178
    %v180 = vpop.f32.mrb[0].mxu0
    %181 = vdwg.mxu0
    %182 = vmatprep.subr.mxu0 0.0
    %v183 = vand.u32 %v93, 4294901760
    %v184 = vsub.f32 %v93, %v183
    %v185 = vand.u32 %v184, 4294901760
    %v186 = vsub.f32 %v184, %v185
    %v187 = vand.u32 %v186, 4294901760
    %188 = vmatpush1.msra.mxu0 %v187
    %189 = vmatprep.subr.mxu0 0.0
    %v190 = vand.u32 %v94, 4294901760
    %v191 = vsub.f32 %v94, %v190
    %v192 = vand.u32 %v191, 4294901760
    %v193 = vsub.f32 %v191, %v192
    %v194 = vand.u32 %v193, 4294901760
    %195 = vmatpush1.msra.mxu0 %v194
    %196 = vmatprep.subr.mxu0 0.0
    %197 = vmatpush1.msra.mxu0 0.0
    %198 = vmatprep.subr.mxu0 0.0
    %199 = vmatpush1.msra.mxu0 0.0
    %200 = vmatprep.subr.mxu0 0.0
    %201 = vmatpush1.msra.mxu0 0.0
    %202 = vmatprep.subr.mxu0 0.0
    %203 = vmatpush1.msra.mxu0 0.0
    %204 = vmatprep.subr.mxu0 0.0
    %205 = vmatpush1.msra.mxu0 0.0
    %206 = vmatprep.subr.mxu0 0.0
    %207 = vmatpush1.msra.mxu0 0.0
    %208 = vmatprep.subr.mxu0 0.0
    %209 = vmatpush1.msra.mxu0 0.0
    %210 = vmatprep.subr.mxu0 0.0
    %211 = vmatpush1.msra.mxu0 0.0
    %212 = vmatprep.subr.mxu0 0.0
    %213 = vmatpush1.msra.mxu0 0.0
    %214 = vmatprep.subr.mxu0 0.0
    %215 = vmatpush1.msra.mxu0 0.0
    %216 = vmatprep.subr.mxu0 0.0
    %217 = vmatpush1.msra.mxu0 0.0
    %218 = vmatprep.subr.mxu0 0.0
    %219 = vmatpush1.msra.mxu0 0.0
    %220 = vmatprep.subr.mxu0 0.0
    %221 = vmatpush1.msra.mxu0 0.0
    %222 = vmatprep.subr.mxu0 0.0
    %223 = vmatpush1.msra.mxu0 0.0
    %224 = vmatprep.subr.mxu0 0.0
    %225 = vmatpush1.msra.mxu0 0.0
    %226 = vmatprep.subr.mxu0 0.0
    %227 = vmatpush1.msra.mxu0 0.0
    %228 = vmatprep.subr.mxu0 0.0
    %229 = vmatpush1.msra.mxu0 0.0
    %230 = vmatprep.subr.mxu0 0.0
    %231 = vmatpush1.msra.mxu0 0.0
    %232 = vmatprep.subr.mxu0 0.0
    %233 = vmatpush1.msra.mxu0 0.0
    %234 = vmatprep.subr.mxu0 0.0
    %235 = vmatpush1.msra.mxu0 0.0
    %236 = vmatprep.subr.mxu0 0.0
    %237 = vmatpush1.msra.mxu0 0.0
    %238 = vmatprep.subr.mxu0 0.0
    %239 = vmatpush1.msra.mxu0 0.0
    %240 = vmatprep.subr.mxu0 0.0
    %241 = vmatpush1.msra.mxu0 0.0
    %242 = vmatprep.subr.mxu0 0.0
    %243 = vmatpush1.msra.mxu0 0.0
    %244 = vmatprep.subr.mxu0 0.0
    %245 = vmatpush1.msra.mxu0 0.0
    %246 = vmatprep.subr.mxu0 0.0
    %247 = vmatpush1.msra.mxu0 0.0
    %248 = vmatprep.subr.mxu0 0.0
    %249 = vmatpush1.msra.mxu0 0.0
    %250 = vmatprep.subr.mxu0 0.0
    %251 = vmatpush1.msra.mxu0 0.0
    %252 = vmatprep.subr.mxu0 0.0
    %253 = vmatpush1.msra.mxu0 0.0
    %254 = vmatprep.subr.mxu0 0.0
    %255 = vmatpush1.msra.mxu0 0.0
    %256 = vmatprep.mubr.f32.mxu0 0.0
    %v257 = vand.u32 %v103, 4294901760
    %258 = vmatmul.mubr.f32.gmra.mrb[0].mxu0 %v257
    %v259 = vpop.f32.mrb[0].mxu0
    %v260 = vadd.f32 %v179, %v259
    %v261 = vpop.f32.mrb[0].mxu0
    %262 = vdwg.mxu0
    %263 = vmatprep.subr.mxu0 0.0
    %v264 = vand.u32 %v93, 4294901760
    %v265 = vsub.f32 %v93, %v264
    %266 = vmatpush1.msra.mxu0 %v265
    %267 = vmatprep.subr.mxu0 0.0
    %v268 = vand.u32 %v94, 4294901760
    %v269 = vsub.f32 %v94, %v268
    %270 = vmatpush1.msra.mxu0 %v269
    %271 = vmatprep.subr.mxu0 0.0
    %272 = vmatpush1.msra.mxu0 0.0
    %273 = vmatprep.subr.mxu0 0.0
    %274 = vmatpush1.msra.mxu0 0.0
    %275 = vmatprep.subr.mxu0 0.0
    %276 = vmatpush1.msra.mxu0 0.0
    %277 = vmatprep.subr.mxu0 0.0
    %278 = vmatpush1.msra.mxu0 0.0
    %279 = vmatprep.subr.mxu0 0.0
    %280 = vmatpush1.msra.mxu0 0.0
    %281 = vmatprep.subr.mxu0 0.0
    %282 = vmatpush1.msra.mxu0 0.0
    %283 = vmatprep.subr.mxu0 0.0
    %284 = vmatpush1.msra.mxu0 0.0
    %285 = vmatprep.subr.mxu0 0.0
    %286 = vmatpush1.msra.mxu0 0.0
    %287 = vmatprep.subr.mxu0 0.0
    %288 = vmatpush1.msra.mxu0 0.0
    %289 = vmatprep.subr.mxu0 0.0
    %290 = vmatpush1.msra.mxu0 0.0
    %291 = vmatprep.subr.mxu0 0.0
    %292 = vmatpush1.msra.mxu0 0.0
    %293 = vmatprep.subr.mxu0 0.0
    %294 = vmatpush1.msra.mxu0 0.0
    %295 = vmatprep.subr.mxu0 0.0
    %296 = vmatpush1.msra.mxu0 0.0
    %297 = vmatprep.subr.mxu0 0.0
    %298 = vmatpush1.msra.mxu0 0.0
    %299 = vmatprep.subr.mxu0 0.0
    %300 = vmatpush1.msra.mxu0 0.0
    %301 = vmatprep.subr.mxu0 0.0
    %302 = vmatpush1.msra.mxu0 0.0
    %303 = vmatprep.subr.mxu0 0.0
    %304 = vmatpush1.msra.mxu0 0.0
    %305 = vmatprep.subr.mxu0 0.0
    %306 = vmatpush1.msra.mxu0 0.0
    %307 = vmatprep.subr.mxu0 0.0
    %308 = vmatpush1.msra.mxu0 0.0
    %309 = vmatprep.subr.mxu0 0.0
    %310 = vmatpush1.msra.mxu0 0.0
    %311 = vmatprep.subr.mxu0 0.0
    %312 = vmatpush1.msra.mxu0 0.0
    %313 = vmatprep.subr.mxu0 0.0
    %314 = vmatpush1.msra.mxu0 0.0
    %315 = vmatprep.subr.mxu0 0.0
    %316 = vmatpush1.msra.mxu0 0.0
    %317 = vmatprep.subr.mxu0 0.0
    %318 = vmatpush1.msra.mxu0 0.0
    %319 = vmatprep.subr.mxu0 0.0
    %320 = vmatpush1.msra.mxu0 0.0
    %321 = vmatprep.subr.mxu0 0.0
    %322 = vmatpush1.msra.mxu0 0.0
    %323 = vmatprep.subr.mxu0 0.0
    %324 = vmatpush1.msra.mxu0 0.0
    %325 = vmatprep.subr.mxu0 0.0
    %326 = vmatpush1.msra.mxu0 0.0
    %327 = vmatprep.subr.mxu0 0.0
    %328 = vmatpush1.msra.mxu0 0.0
    %329 = vmatprep.subr.mxu0 0.0
    %330 = vmatpush1.msra.mxu0 0.0
    %331 = vmatprep.mubr.f32.mxu0 0.0
    %v332 = vand.u32 %v103, 4294901760
    %v333 = vsub.f32 %v103, %v332
    %334 = vmatmul.mubr.f32.gmra.mrb[0].mxu0 %v333
    %v335 = vpop.f32.mrb[0].mxu0
    %v336 = vadd.f32 %v260, %v335
    %v337 = vpop.f32.mrb[0].mxu0
    %338 = vdwg.mxu0
    %339 = vmatprep.subr.mxu0 0.0
    %v340 = vand.u32 %v93, 4294901760
    %341 = vmatpush1.msra.mxu0 %v340
    %342 = vmatprep.subr.mxu0 0.0
    %v343 = vand.u32 %v94, 4294901760
    %344 = vmatpush1.msra.mxu0 %v343
    %345 = vmatprep.subr.mxu0 0.0
    %346 = vmatpush1.msra.mxu0 0.0
    %347 = vmatprep.subr.mxu0 0.0
    %348 = vmatpush1.msra.mxu0 0.0
    %349 = vmatprep.subr.mxu0 0.0
    %350 = vmatpush1.msra.mxu0 0.0
    %351 = vmatprep.subr.mxu0 0.0
    %352 = vmatpush1.msra.mxu0 0.0
    %353 = vmatprep.subr.mxu0 0.0
    %354 = vmatpush1.msra.mxu0 0.0
    %355 = vmatprep.subr.mxu0 0.0
    %356 = vmatpush1.msra.mxu0 0.0
    %357 = vmatprep.subr.mxu0 0.0
    %358 = vmatpush1.msra.mxu0 0.0
    %359 = vmatprep.subr.mxu0 0.0
    %360 = vmatpush1.msra.mxu0 0.0
    %361 = vmatprep.subr.mxu0 0.0
    %362 = vmatpush1.msra.mxu0 0.0
    %363 = vmatprep.subr.mxu0 0.0
    %364 = vmatpush1.msra.mxu0 0.0
    %365 = vmatprep.subr.mxu0 0.0
    %366 = vmatpush1.msra.mxu0 0.0
    %367 = vmatprep.subr.mxu0 0.0
    %368 = vmatpush1.msra.mxu0 0.0
    %369 = vmatprep.subr.mxu0 0.0
    %370 = vmatpush1.msra.mxu0 0.0
    %371 = vmatprep.subr.mxu0 0.0
    %372 = vmatpush1.msra.mxu0 0.0
    %373 = vmatprep.subr.mxu0 0.0
    %374 = vmatpush1.msra.mxu0 0.0
    %375 = vmatprep.subr.mxu0 0.0
    %376 = vmatpush1.msra.mxu0 0.0
    %377 = vmatprep.subr.mxu0 0.0
    %378 = vmatpush1.msra.mxu0 0.0
    %379 = vmatprep.subr.mxu0 0.0
    %380 = vmatpush1.msra.mxu0 0.0
    %381 = vmatprep.subr.mxu0 0.0
    %382 = vmatpush1.msra.mxu0 0.0
    %383 = vmatprep.subr.mxu0 0.0
    %384 = vmatpush1.msra.mxu0 0.0
    %385 = vmatprep.subr.mxu0 0.0
    %386 = vmatpush1.msra.mxu0 0.0
    %387 = vmatprep.subr.mxu0 0.0
    %388 = vmatpush1.msra.mxu0 0.0
    %389 = vmatprep.subr.mxu0 0.0
    %390 = vmatpush1.msra.mxu0 0.0
    %391 = vmatprep.subr.mxu0 0.0
    %392 = vmatpush1.msra.mxu0 0.0
    %393 = vmatprep.subr.mxu0 0.0
    %394 = vmatpush1.msra.mxu0 0.0
    %395 = vmatprep.subr.mxu0 0.0
    %396 = vmatpush1.msra.mxu0 0.0
    %397 = vmatprep.subr.mxu0 0.0
    %398 = vmatpush1.msra.mxu0 0.0
    %399 = vmatprep.subr.mxu0 0.0
    %400 = vmatpush1.msra.mxu0 0.0
    %401 = vmatprep.subr.mxu0 0.0
    %402 = vmatpush1.msra.mxu0 0.0
    %403 = vmatprep.subr.mxu0 0.0
    %404 = vmatpush1.msra.mxu0 0.0
    %405 = vmatprep.mubr.f32.mxu0 0.0
    %v406 = vand.u32 %v103, 4294901760
    %v407 = vsub.f32 %v103, %v406
    %v408 = vand.u32 %v407, 4294901760
    %409 = vmatmul.mubr.f32.gmra.mrb[0].mxu0 %v408
    %v410 = vpop.f32.mrb[0].mxu0
    %v411 = vadd.f32 %v336, %v410
    %v412 = vpop.f32.mrb[0].mxu0
    %413 = vdwg.mxu0
    %414 = vmatprep.subr.mxu0 0.0
    %v415 = vand.u32 %v93, 4294901760
    %v416 = vsub.f32 %v93, %v415
    %v417 = vand.u32 %v416, 4294901760
    %418 = vmatpush1.msra.mxu0 %v417
    %419 = vmatprep.subr.mxu0 0.0
    %v420 = vand.u32 %v94, 4294901760
    %v421 = vsub.f32 %v94, %v420
    %v422 = vand.u32 %v421, 4294901760
    %423 = vmatpush1.msra.mxu0 %v422
    %424 = vmatprep.subr.mxu0 0.0
    %425 = vmatpush1.msra.mxu0 0.0
    %426 = vmatprep.subr.mxu0 0.0
    %427 = vmatpush1.msra.mxu0 0.0
    %428 = vmatprep.subr.mxu0 0.0
    %429 = vmatpush1.msra.mxu0 0.0
    %430 = vmatprep.subr.mxu0 0.0
    %431 = vmatpush1.msra.mxu0 0.0
    %432 = vmatprep.subr.mxu0 0.0
    %433 = vmatpush1.msra.mxu0 0.0
    %434 = vmatprep.subr.mxu0 0.0
    %435 = vmatpush1.msra.mxu0 0.0
    %436 = vmatprep.subr.mxu0 0.0
    %437 = vmatpush1.msra.mxu0 0.0
    %438 = vmatprep.subr.mxu0 0.0
    %439 = vmatpush1.msra.mxu0 0.0
    %440 = vmatprep.subr.mxu0 0.0
    %441 = vmatpush1.msra.mxu0 0.0
    %442 = vmatprep.subr.mxu0 0.0
    %443 = vmatpush1.msra.mxu0 0.0
    %444 = vmatprep.subr.mxu0 0.0
    %445 = vmatpush1.msra.mxu0 0.0
    %446 = vmatprep.subr.mxu0 0.0
    %447 = vmatpush1.msra.mxu0 0.0
    %448 = vmatprep.subr.mxu0 0.0
    %449 = vmatpush1.msra.mxu0 0.0
    %450 = vmatprep.subr.mxu0 0.0
    %451 = vmatpush1.msra.mxu0 0.0
    %452 = vmatprep.subr.mxu0 0.0
    %453 = vmatpush1.msra.mxu0 0.0
    %454 = vmatprep.subr.mxu0 0.0
    %455 = vmatpush1.msra.mxu0 0.0
    %456 = vmatprep.subr.mxu0 0.0
    %457 = vmatpush1.msra.mxu0 0.0
    %458 = vmatprep.subr.mxu0 0.0
    %459 = vmatpush1.msra.mxu0 0.0
    %460 = vmatprep.subr.mxu0 0.0
    %461 = vmatpush1.msra.mxu0 0.0
    %462 = vmatprep.subr.mxu0 0.0
    %463 = vmatpush1.msra.mxu0 0.0
    %464 = vmatprep.subr.mxu0 0.0
    %465 = vmatpush1.msra.mxu0 0.0
    %466 = vmatprep.subr.mxu0 0.0
    %467 = vmatpush1.msra.mxu0 0.0
    %468 = vmatprep.subr.mxu0 0.0
    %469 = vmatpush1.msra.mxu0 0.0
    %470 = vmatprep.subr.mxu0 0.0
    %471 = vmatpush1.msra.mxu0 0.0
    %472 = vmatprep.subr.mxu0 0.0
    %473 = vmatpush1.msra.mxu0 0.0
    %474 = vmatprep.subr.mxu0 0.0
    %475 = vmatpush1.msra.mxu0 0.0
    %476 = vmatprep.subr.mxu0 0.0
    %477 = vmatpush1.msra.mxu0 0.0
    %478 = vmatprep.subr.mxu0 0.0
    %479 = vmatpush1.msra.mxu0 0.0
    %480 = vmatprep.subr.mxu0 0.0
    %481 = vmatpush1.msra.mxu0 0.0
    %482 = vmatprep.subr.mxu0 0.0
    %483 = vmatpush1.msra.mxu0 0.0
    %484 = vmatprep.mubr.f32.mxu0 0.0
    %v485 = vand.u32 %v103, 4294901760
    %486 = vmatmul.mubr.f32.gmra.mrb[0].mxu0 %v485
    %v487 = vpop.f32.mrb[0].mxu0
    %v488 = vadd.f32 %v411, %v487
    %v489 = vpop.f32.mrb[0].mxu0
    %490 = vdwg.mxu0
    %491 = vmatprep.subr.mxu0 0.0
    %v492 = vand.u32 %v93, 4294901760
    %493 = vmatpush1.msra.mxu0 %v492
    %494 = vmatprep.subr.mxu0 0.0
    %v495 = vand.u32 %v94, 4294901760
    %496 = vmatpush1.msra.mxu0 %v495
    %497 = vmatprep.subr.mxu0 0.0
    %498 = vmatpush1.msra.mxu0 0.0
    %499 = vmatprep.subr.mxu0 0.0
    %500 = vmatpush1.msra.mxu0 0.0
    %501 = vmatprep.subr.mxu0 0.0
    %502 = vmatpush1.msra.mxu0 0.0
    %503 = vmatprep.subr.mxu0 0.0
    %504 = vmatpush1.msra.mxu0 0.0
    %505 = vmatprep.subr.mxu0 0.0
    %506 = vmatpush1.msra.mxu0 0.0
    %507 = vmatprep.subr.mxu0 0.0
    %508 = vmatpush1.msra.mxu0 0.0
    %509 = vmatprep.subr.mxu0 0.0
    %510 = vmatpush1.msra.mxu0 0.0
    %511 = vmatprep.subr.mxu0 0.0
    %512 = vmatpush1.msra.mxu0 0.0
    %513 = vmatprep.subr.mxu0 0.0
    %514 = vmatpush1.msra.mxu0 0.0
    %515 = vmatprep.subr.mxu0 0.0
    %516 = vmatpush1.msra.mxu0 0.0
    %517 = vmatprep.subr.mxu0 0.0
    %518 = vmatpush1.msra.mxu0 0.0
    %519 = vmatprep.subr.mxu0 0.0
    %520 = vmatpush1.msra.mxu0 0.0
    %521 = vmatprep.subr.mxu0 0.0
    %522 = vmatpush1.msra.mxu0 0.0
    %523 = vmatprep.subr.mxu0 0.0
    %524 = vmatpush1.msra.mxu0 0.0
    %525 = vmatprep.subr.mxu0 0.0
    %526 = vmatpush1.msra.mxu0 0.0
    %527 = vmatprep.subr.mxu0 0.0
    %528 = vmatpush1.msra.mxu0 0.0
    %529 = vmatprep.subr.mxu0 0.0
    %530 = vmatpush1.msra.mxu0 0.0
    %531 = vmatprep.subr.mxu0 0.0
    %532 = vmatpush1.msra.mxu0 0.0
    %533 = vmatprep.subr.mxu0 0.0
    %534 = vmatpush1.msra.mxu0 0.0
    %535 = vmatprep.subr.mxu0 0.0
    %536 = vmatpush1.msra.mxu0 0.0
    %537 = vmatprep.subr.mxu0 0.0
    %538 = vmatpush1.msra.mxu0 0.0
    %539 = vmatprep.subr.mxu0 0.0
    %540 = vmatpush1.msra.mxu0 0.0
    %541 = vmatprep.subr.mxu0 0.0
    %542 = vmatpush1.msra.mxu0 0.0
    %543 = vmatprep.subr.mxu0 0.0
    %544 = vmatpush1.msra.mxu0 0.0
    %545 = vmatprep.subr.mxu0 0.0
    %546 = vmatpush1.msra.mxu0 0.0
    %547 = vmatprep.subr.mxu0 0.0
    %548 = vmatpush1.msra.mxu0 0.0
    %549 = vmatprep.subr.mxu0 0.0
    %550 = vmatpush1.msra.mxu0 0.0
    %551 = vmatprep.subr.mxu0 0.0
    %552 = vmatpush1.msra.mxu0 0.0
    %553 = vmatprep.subr.mxu0 0.0
    %554 = vmatpush1.msra.mxu0 0.0
    %555 = vmatprep.subr.mxu0 0.0
    %556 = vmatpush1.msra.mxu0 0.0
    %557 = vmatprep.mubr.f32.mxu0 0.0
    %v558 = vand.u32 %v103, 4294901760
    %559 = vmatmul.mubr.f32.gmra.mrb[0].mxu0 %v558
    %v560 = vpop.f32.mrb[0].mxu0
    %v561 = vadd.f32 %v488, %v560
    %v562 = vpop.f32.mrb[0].mxu0
    %563 = vdwg.mxu0
    %v564 = vtanh.pop %v561
    %vm565 = vcmask 261120
    %566 = vst.msk [vmem:[#allocation9] sm:$0xff] %vm565, %v564
    // Predicated region
    $region26: #{tpu_custom_call.1} parent=1 // pred_check
      _
    $region27: #{tpu_custom_call.1} parent=1 // pred_check_branch
      %568 = sbr.rel (0) target = $region29
    $region28: #{tpu_custom_call.1} parent=1 // pred_region
      %s570 = ssub.s32 128, 128
      %571 = vsyncadd [#allocation5], %s570
      %s573 = sshll.u32 [#allocation9], 4
      %s574 = int_to_ptr.vmem [resolvable:$true] %s573
      %576 = dma.vmem_to_hbm [thread:$0]  %s574, 128, %s3, [#allocation5]
    $region29: #{tpu_custom_call.1} parent=1 // pred_fallthru
      _
    // Predicated region
    $region30: #{tpu_custom_call.1} parent=1 // pred_check
      _
    $region31: #{tpu_custom_call.1} parent=1 // pred_check_branch
      %578 = sbr.rel (0) target = $region33
    $region32: #{tpu_custom_call.1} parent=1 // pred_region
      %579 = dma.done [#allocation5], 128
    $region33: #{tpu_custom_call.1} parent=1 // pred_fallthru
      _
    %580 = vsyncpa [#allocation4], 1
    %581 = vsyncpa [#allocation7], 1
    %582 = vsyncpa [#allocation5], 1

</llo_original>
